<compile_context>
chip_gen: v6e
topology: v6e:2x2x1
jax: 0.10.0
libtpu: 0.0.40
codegen_flags: <defaults>
</compile_context>

<pallas_src>
import jax
import jax.numpy as jnp
import numpy as np
from jax.experimental import pallas as pl
from jax.experimental.pallas import tpu as pltpu

_TARGET_BLOCK_BYTES = 2 * 1024 * 1024  # ~2 MiB per block buffer per array


def _perturb_kernel(eps_ref, x_ref, w_ref, o_ref):
    eps = eps_ref[0]                                   # SMEM scalar
    x = x_ref[...].astype(jnp.float32)
    t = jnp.tanh(w_ref[...].astype(jnp.float32))       # EUP transcendental
    cmin = jnp.minimum(x, eps)                         # clamp(x,   max=eps)
    cmax = jnp.minimum(1.0 - x, eps)                   # clamp(1-x, max=eps)
    delta = jnp.minimum(cmin * t, 0.0) + jnp.maximum(cmax * t, 0.0)
    o_ref[...] = (x + delta).astype(o_ref.dtype)


def _choose_width(total):
    """Widest lane-dense last dim (multiple of 128) dividing `total`; else pad."""
    for width in (2048, 1024, 512, 256, 128):
        if total % width == 0:
            return width, 0
    width = 1024
    pad = width - (total % width)
    return width, pad


def _choose_block_rows(rows, width, itemsize):
    target = max(8, _TARGET_BLOCK_BYTES // (width * itemsize))
    if rows <= target:
        return rows                     # single block: full-dim block is legal
    return max(8, (target // 8) * 8)    # multiple of 8; remainder block is masked


def perturbed_input(x, w_matrix, epsilon):
    """x + PerturbationNet.delta(w_matrix, x, epsilon), computed in Pallas."""
    assert x.shape == w_matrix.shape
    orig_shape = x.shape
    out_dtype = x.dtype
    total = int(np.prod(orig_shape))

    width, pad = _choose_width(total)
    xf = x.reshape(-1)
    wf = w_matrix.reshape(-1)
    if pad:
        xf = jnp.pad(xf, (0, pad))
        wf = jnp.pad(wf, (0, pad))
    rows = (total + pad) // width

    itemsize = max(jnp.dtype(x.dtype).itemsize, jnp.dtype(w_matrix.dtype).itemsize)
    block_rows = _choose_block_rows(rows, width, itemsize)

    x2 = xf.reshape(rows, width)
    w2 = wf.reshape(rows, width)
    eps_arr = jnp.asarray([epsilon], dtype=jnp.float32)

    tile = pl.BlockSpec((block_rows, width), lambda i: (i, 0))
    bytes_accessed = (2 * itemsize + jnp.dtype(out_dtype).itemsize) * total

    out = pl.pallas_call(
        _perturb_kernel,
        out_shape=jax.ShapeDtypeStruct((rows, width), out_dtype),
        grid=(pl.cdiv(rows, block_rows),),
        in_specs=[
            pl.BlockSpec(memory_space=pltpu.MemorySpace.SMEM),  # epsilon scalar
            tile,                                               # x
            tile,                                               # w
        ],
        out_specs=tile,
        compiler_params=pltpu.CompilerParams(
            dimension_semantics=("parallel",),       # v7x: shard loop over 2 TCs
            vmem_limit_bytes=32 * 1024 * 1024,       # ~12 MiB used; safe on v7x too
        ),
        cost_estimate=pl.CostEstimate(
            flops=8 * total,
            transcendentals=total,
            bytes_accessed=bytes_accessed,
        ),
    )(eps_arr, x2, w2)

    out = out.reshape(-1)
    if pad:
        out = out[:total]
    return out.reshape(orig_shape)


class PerturbationNet:
    """JAX/Pallas port of the PyTorch PerturbationNet module."""

    def __init__(self, defense_ensemble, defense_augmentation, epsilon,
                 prob_dont_augment):
        self.defense_ensemble = defense_ensemble
        self.defense_augmentation = defense_augmentation
        self.epsilon = epsilon
        self.prob_dont_augment = prob_dont_augment
        self.w_matrix = None

    def set_w_matrix(self, w_matrix):
        self.w_matrix = w_matrix

    def forward(self, x):
        perturbed = perturbed_input(x, self.w_matrix, self.epsilon)
        # Host-side stochastic branch, identical semantics to the PyTorch code.
        if np.random.rand() < self.prob_dont_augment:
            augmented = perturbed
        else:
            augmented = self.defense_augmentation(perturbed)
        # TODO(synk): defense_ensemble / defense_augmentation are external
        # user-supplied networks; identity callables are used here.
        output = self.defense_ensemble(augmented)
        return output


def _reference_delta(w, x, epsilon):
    cmin = jnp.minimum(x, epsilon)
    cmax = jnp.minimum(1.0 - x, epsilon)
    t = jnp.tanh(w)
    return jnp.clip(cmin * t, -999.0, 0.0) + jnp.clip(cmax * t, 0.0, 999.0)


if __name__ == "__main__":
    np.random.seed(0)  # deterministic host-side augmentation branch

    B, C, H, W = 2, 4, 16, 16  # NCHW, matches the PyTorch conv-input convention
    key = jax.random.PRNGKey(0)
    kx, kw = jax.random.split(key)
    x = jax.random.uniform(kx, (B, C, H, W), dtype=jnp.float32)        # image in [0,1]
    w_matrix = jax.random.normal(kw, (B, C, H, W), dtype=jnp.float32)  # perturbation params

    epsilon = 16.0 / 255.0
    identity = lambda z: z
    net = PerturbationNet(defense_ensemble=identity,
                          defense_augmentation=identity,
                          epsilon=epsilon,
                          prob_dont_augment=0.5)
    net.set_w_matrix(w_matrix)

    out = net.forward(x)
    out = jax.block_until_ready(out)

    # Correctness check against a pure-JAX reference of the forward math.
    ref = x + _reference_delta(w_matrix, x, epsilon)
    np.testing.assert_allclose(np.asarray(out), np.asarray(ref),
                               rtol=1e-6, atol=1e-6)
    print("KERNEL_OK")
</pallas_src>

<mosaic_0001>
module attributes {stable_mosaic.version = 11 : i64} {
  func.func @_perturb_kernel(%arg0: i32, %arg1: memref<1xf32, #tpu.memory_space<smem>>, %arg2: memref<1x2048xf32, #tpu.memory_space<vmem>>, %arg3: memref<1x2048xf32, #tpu.memory_space<vmem>>, %arg4: memref<1x2048xf32, #tpu.memory_space<vmem>>) attributes {dimension_semantics = [#tpu.dimension_semantics<parallel>], iteration_bounds = array<i64: 1>, scalar_prefetch = 0 : i64, scratch_operands = 0 : i64, tpu.core_type = #tpu.core_type<tc>, window_params = [{transform_indices = @transform_0, window_bounds = array<i64: 1>}, {transform_indices = @transform_1, window_bounds = array<i64: 1, 2048>}, {transform_indices = @transform_2, window_bounds = array<i64: 1, 2048>}, {transform_indices = @transform_3, window_bounds = array<i64: 1, 2048>}]} {
    %c0 = arith.constant 0 : index
    %0 = memref.load %arg1[%c0] : memref<1xf32, #tpu.memory_space<smem>>
    %c0_0 = arith.constant 0 : index
    %c0_1 = arith.constant 0 : index
    %1 = vector.load %arg2[%c0_0, %c0_1] : memref<1x2048xf32, #tpu.memory_space<vmem>>, vector<1x2048xf32>
    %c0_2 = arith.constant 0 : index
    %c0_3 = arith.constant 0 : index
    %2 = vector.load %arg3[%c0_2, %c0_3] : memref<1x2048xf32, #tpu.memory_space<vmem>>, vector<1x2048xf32>
    %3 = math.tanh %2 : vector<1x2048xf32>
    %4 = vector.broadcast %0 : f32 to vector<1x2048xf32>
    %5 = arith.minimumf %1, %4 : vector<1x2048xf32>
    %cst = arith.constant 1.000000e+00 : f32
    %6 = vector.broadcast %cst : f32 to vector<1x2048xf32>
    %7 = arith.subf %6, %1 : vector<1x2048xf32>
    %8 = vector.broadcast %0 : f32 to vector<1x2048xf32>
    %9 = arith.minimumf %7, %8 : vector<1x2048xf32>
    %10 = arith.mulf %5, %3 : vector<1x2048xf32>
    %cst_4 = arith.constant 0.000000e+00 : f32
    %11 = vector.broadcast %cst_4 : f32 to vector<1x2048xf32>
    %12 = arith.minimumf %10, %11 : vector<1x2048xf32>
    %13 = arith.mulf %9, %3 : vector<1x2048xf32>
    %cst_5 = arith.constant 0.000000e+00 : f32
    %14 = vector.broadcast %cst_5 : f32 to vector<1x2048xf32>
    %15 = arith.maximumf %13, %14 : vector<1x2048xf32>
    %16 = arith.addf %12, %15 : vector<1x2048xf32>
    %17 = arith.addf %1, %16 : vector<1x2048xf32>
    %c0_6 = arith.constant 0 : index
    %c0_7 = arith.constant 0 : index
    %18 = vector.load %arg4[%c0_6, %c0_7] : memref<1x2048xf32, #tpu.memory_space<vmem>>, vector<1x2048xf32>
    tpu.vector_store %arg4[%c0_6, %c0_7], %17 {strides = array<i32>} : memref<1x2048xf32, #tpu.memory_space<vmem>>, vector<1x2048xf32>,
    return
  }
  func.func @transform_0(%arg0: i32) -> i32 {
    %c0_i32 = arith.constant 0 : i32
    %c0_i32_0 = arith.constant 0 : i32
    return %c0_i32 : i32
  }
  func.func @transform_1(%arg0: i32) -> (i32, i32) {
    %c0_i32 = arith.constant 0 : i32
    %c0_i32_0 = arith.constant 0 : i32
    return %arg0, %c0_i32 : i32, i32
  }
  func.func @transform_2(%arg0: i32) -> (i32, i32) {
    %c0_i32 = arith.constant 0 : i32
    %c0_i32_0 = arith.constant 0 : i32
    return %arg0, %c0_i32 : i32, i32
  }
  func.func @transform_3(%arg0: i32) -> (i32, i32) {
    %c0_i32 = arith.constant 0 : i32
    %c0_i32_0 = arith.constant 0 : i32
    return %arg0, %c0_i32 : i32, i32
  }
}

</mosaic_0001>

<llo_original>
// kernel: tpu_custom_call.1
$region0: #{tpu_custom_call.1}
  #allocation0 [shape = 'u32[]', space=smem, size = 0x4, offset = 0x4, fixed_abs, tag = 'smem constant byte address 0x4 - core index']
  #allocation1 [shape = 'u32[144,128]{1,0:T(1,128)}', space=vmem, size = 0x12000, scoped, tag = 'internal scratch']
  #allocation2 [shape = 'f32[1]{0:T(128)S(6)}', space=smem, size = 0x200, scoped, tag = 'scoped memory for tpu_custom_call.1']
  %s0 = inlined_call_operand.<no memory space> [shape: f32[1], index: 0, kind: input, shape index: {}]
  %s1 = inlined_call_operand.hbm [shape: f32[1,2048], index: 1, kind: input, shape index: {}]
  %s2 = inlined_call_operand.hbm [shape: f32[1,2048], index: 2, kind: input, shape index: {}]
  %s3 = inlined_call_operand.hbm [shape: f32[1,2048], index: 3, kind: output, shape index: {}]
  %s4 = sld [smem:[#allocation0]]
  $region30: #{tpu_custom_call.1} parent=0
    _
  %s6 = ssub.s32 1, %s4
  %s7 = scalar_select 0, %s6, %s4
  %8 = sst [smem:[#allocation2]] %s0
  $region1: #{tpu_custom_call.1} parent=0
    #allocation3 [shape = 'u8[8192]{0}', space=vmem, size = 0x2000, scoped, tag = 'input window, operand 1, single buffered']
    #allocation4 [shape = 's32[1]{0}', space=sflag, size = 0x4, scoped, tag = 'scoped memory for tpu_custom_call.1']
    #allocation5 [shape = 's32[1]{0}', space=sflag, size = 0x4, scoped, tag = 'scoped memory for tpu_custom_call.1']
    #allocation6 [shape = 'u8[8192]{0}', space=vmem, size = 0x2000, scoped, tag = 'input window, operand 2, single buffered']
    #allocation7 [shape = 's32[1]{0}', space=sflag, size = 0x4, scoped, tag = 'scoped memory for tpu_custom_call.1']
    #allocation8 [shape = 'u8[8192]{0}', space=vmem, size = 0x2000, scoped, tag = 'output window, operand 0, single buffered']
    %9 = vsyncpa [#allocation4], 0
    %10 = vsyncpa [#allocation7], 0
    %11 = vsyncpa [#allocation5], 0
    // Predicated region
    $region2: #{tpu_custom_call.1} parent=1 // pred_check
      _
    $region3: #{tpu_custom_call.1} parent=1 // pred_check_branch
      %13 = sbr.rel (0) target = $region5
    $region4: #{tpu_custom_call.1} parent=1 // pred_region
      _
    $region5: #{tpu_custom_call.1} parent=1 // pred_fallthru
      _
    // Predicated region
    $region6: #{tpu_custom_call.1} parent=1 // pred_check
      _
    $region7: #{tpu_custom_call.1} parent=1 // pred_check_branch
      %15 = sbr.rel (0) target = $region9
    $region8: #{tpu_custom_call.1} parent=1 // pred_region
      %s17 = ssub.s32 256, 256
      %18 = vsyncadd [#allocation4], %s17
      %s20 = sshll.u32 [#allocation3], 4
      %s21 = int_to_ptr.vmem [resolvable:$true] %s20
      %23 = dma.hbm_to_vmem [thread:$0]  %s1, 256, %s21, [#allocation4]
    $region9: #{tpu_custom_call.1} parent=1 // pred_fallthru
      _
    // Predicated region
    $region10: #{tpu_custom_call.1} parent=1 // pred_check
      _
    $region11: #{tpu_custom_call.1} parent=1 // pred_check_branch
      %25 = sbr.rel (0) target = $region13
    $region12: #{tpu_custom_call.1} parent=1 // pred_region
      %s27 = ssub.s32 256, 256
      %28 = vsyncadd [#allocation7], %s27
      %s30 = sshll.u32 [#allocation6], 4
      %s31 = int_to_ptr.vmem [resolvable:$true] %s30
      %33 = dma.hbm_to_vmem [thread:$0]  %s2, 256, %s31, [#allocation7]
    $region13: #{tpu_custom_call.1} parent=1 // pred_fallthru
      _
    // Predicated region
    $region14: #{tpu_custom_call.1} parent=1 // pred_check
      _
    $region15: #{tpu_custom_call.1} parent=1 // pred_check_branch
      %35 = sbr.rel (0) target = $region17
    $region16: #{tpu_custom_call.1} parent=1 // pred_region
      %36 = dma.done [#allocation4], 256
    $region17: #{tpu_custom_call.1} parent=1 // pred_fallthru
      _
    // Predicated region
    $region18: #{tpu_custom_call.1} parent=1 // pred_check
      _
    $region19: #{tpu_custom_call.1} parent=1 // pred_check_branch
      %38 = sbr.rel (0) target = $region21
    $region20: #{tpu_custom_call.1} parent=1 // pred_region
      %39 = dma.done [#allocation7], 256
    $region21: #{tpu_custom_call.1} parent=1 // pred_fallthru
      _
    %s40 = sld [smem:[#allocation2]]
    %v41 = vld [vmem:[#allocation3] sm:$0xff]
    %v42 = vld [vmem:[#allocation3 + $0x8] sm:$0xff]
    %v43 = vld [vmem:[#allocation6] sm:$0xff]
    %v44 = vld [vmem:[#allocation6 + $0x8] sm:$0xff]
    %v45 = vtanh.pop %v43
    %v46 = vtanh.pop %v44
    %v47 = vstv %s40
    %v48 = vmin.f32 %v41, %v47
    %v49 = vmin.f32 %v42, %v47
    %v50 = vsub.f32 1.0, %v41
    %v51 = vsub.f32 1.0, %v42
    %v52 = vmin.f32 %v50, %v47
    %v53 = vmin.f32 %v51, %v47
    %v54 = vmul.f32 %v48, %v45
    %v55 = vmul.f32 %v49, %v46
    %v56 = vmin.f32 %v54, 0.0
    %v57 = vmin.f32 %v55, 0.0
    %v58 = vmul.f32 %v52, %v45
    %v59 = vmul.f32 %v53, %v46
    %v60 = vmax.f32 %v58, 0.0
    %v61 = vmax.f32 %v59, 0.0
    %v62 = vadd.f32 %v56, %v60
    %v63 = vadd.f32 %v57, %v61
    %v64 = vadd.f32 %v41, %v62
    %v65 = vadd.f32 %v42, %v63
    %66 = vst [vmem:[#allocation8] sm:$0xff] %v64
    %67 = vst [vmem:[#allocation8 + $0x8] sm:$0xff] %v65
    // Predicated region
    $region22: #{tpu_custom_call.1} parent=1 // pred_check
      _
    $region23: #{tpu_custom_call.1} parent=1 // pred_check_branch
      %69 = sbr.rel (0) target = $region25
    $region24: #{tpu_custom_call.1} parent=1 // pred_region
      %s71 = ssub.s32 256, 256
      %72 = vsyncadd [#allocation5], %s71
      %s74 = sshll.u32 [#allocation8], 4
      %s75 = int_to_ptr.vmem [resolvable:$true] %s74
      %77 = dma.vmem_to_hbm [thread:$0]  %s75, 256, %s3, [#allocation5]
    $region25: #{tpu_custom_call.1} parent=1 // pred_fallthru
      _
    // Predicated region
    $region26: #{tpu_custom_call.1} parent=1 // pred_check
      _
    $region27: #{tpu_custom_call.1} parent=1 // pred_check_branch
      %79 = sbr.rel (0) target = $region29
    $region28: #{tpu_custom_call.1} parent=1 // pred_region
      %80 = dma.done [#allocation5], 256
    $region29: #{tpu_custom_call.1} parent=1 // pred_fallthru
      _
    %81 = vsyncpa [#allocation4], 1
    %82 = vsyncpa [#allocation7], 1
    %83 = vsyncpa [#allocation5], 1

</llo_original>
